<compile_context>
chip_gen: v7x
topology: tpu7x:2x2x1
jax: 0.10.0
libtpu: 0.0.40
codegen_flags: <defaults>
</compile_context>

<pallas_src>
import jax
import jax.numpy as jnp
from jax.experimental import pallas as pl
from jax.experimental.pallas import tpu as pltpu


# Route to the per-batch path while a (conservatively padded) per-batch VMEM
# tile stays small enough that double-buffered input+output blocks fit the
# scoped VMEM limit on all generations (limit raised to 32 MiB on that path).
_SMALL_PATH_MAX_PADDED_BYTES = 4 * 1024 * 1024
# Per-block cap for the per-channel (pure-DMA-permutation) path.
_PER_CHANNEL_BLOCK_BYTES = 2 * 1024 * 1024


def _round_up(v: int, m: int) -> int:
    return ((v + m - 1) // m) * m


def _pick_hw_tile(hw: int, itemsize: int) -> int:
    """Largest lane-aligned tile of the flattened H*W axis that divides hw and
    keeps a single block under _PER_CHANNEL_BLOCK_BYTES."""
    max_elems = max(128, _PER_CHANNEL_BLOCK_BYTES // itemsize)
    if hw <= max_elems:
        return hw
    t = (max_elems // 128) * 128
    while t >= 128:
        if hw % t == 0:
            return t
        t -= 128
    return hw  # no lane-aligned divisor; fall back to the full extent


def _copy_kernel(x_ref, o_ref):
    # Pure copy: the channel permutation is done by the input index_map (DMA).
    o_ref[...] = x_ref[...]


def _shuffle_per_batch_kernel(x_ref, o_ref):
    # x_ref: (1, G, C/G, 1, HW); o_ref: (1, C/G, G, 1, HW).
    # Leading-dim transpose only; the lane-dense (1, HW) minor dims are fixed.
    o_ref[...] = jnp.transpose(x_ref[...], (0, 2, 1, 3, 4))


def channel_shuffle(x: jax.Array, groups: int, *, mode: str = "auto") -> jax.Array:
    """ChannelShuffle forward pass.  x: (B, C, H, W) with C % groups == 0.

    mode: "auto" | "per_batch" | "per_channel" (explicit modes mainly for tests).
    """
    b, c, h, w = x.shape
    if c % groups != 0:
        raise ValueError("channels must be divisible by groups")
    cpg = c // groups
    if groups == 1 or cpg == 1:
        return x  # identity permutation: no data movement needed

    hw = h * w
    itemsize = jnp.dtype(x.dtype).itemsize

    if mode == "auto":
        # Conservative (sublane/lane padded) estimate of the per-batch VMEM tile.
        padded_slab = c * 8 * _round_up(hw, 128) * itemsize
        mode = ("per_batch" if padded_slab <= _SMALL_PATH_MAX_PADDED_BYTES
                else "per_channel")

    cost = pl.CostEstimate(flops=0, transcendentals=0,
                           bytes_accessed=2 * b * c * hw * itemsize)

    if mode == "per_batch":
        # One whole image per step; shuffle as a leading-dim transpose on a
        # lane-dense (..., 1, HW) view.
        x5 = x.reshape(b, groups, cpg, 1, hw)
        out5 = pl.pallas_call(
            _shuffle_per_batch_kernel,
            out_shape=jax.ShapeDtypeStruct((b, cpg, groups, 1, hw), x.dtype),
            grid_spec=pltpu.PrefetchScalarGridSpec(
                num_scalar_prefetch=0,
                grid=(b,),
                in_specs=[pl.BlockSpec((1, groups, cpg, 1, hw),
                                       lambda i: (i, 0, 0, 0, 0))],
                out_specs=pl.BlockSpec((1, cpg, groups, 1, hw),
                                       lambda i: (i, 0, 0, 0, 0)),
            ),
            compiler_params=pltpu.CompilerParams(
                dimension_semantics=("parallel",),
                vmem_limit_bytes=32 * 1024 * 1024,
            ),
            cost_estimate=cost,
        )(x5)
        return out5.reshape(b, c, h, w)

    if mode != "per_channel":
        raise ValueError(f"unknown mode: {mode!r}")

    # Pure-DMA permutation: grid over (batch, output channel, HW tile); the
    # input index_map selects the permuted source channel, kernel only copies.
    hw_tile = _pick_hw_tile(hw, itemsize)
    x4 = x.reshape(b, c, 1, hw)

    def in_map(i, j, t):
        return (i, (j % groups) * cpg + j // groups, 0, t)

    def out_map(i, j, t):
        return (i, j, 0, t)

    out4 = pl.pallas_call(
        _copy_kernel,
        out_shape=jax.ShapeDtypeStruct((b, c, 1, hw), x.dtype),
        grid_spec=pltpu.PrefetchScalarGridSpec(
            num_scalar_prefetch=0,
            grid=(b, c, hw // hw_tile),
            in_specs=[pl.BlockSpec((1, 1, 1, hw_tile), in_map)],
            out_specs=pl.BlockSpec((1, 1, 1, hw_tile), out_map),
        ),
        compiler_params=pltpu.CompilerParams(
            dimension_semantics=("parallel", "parallel", "parallel")),
        cost_estimate=cost,
    )(x4)
    return out4.reshape(b, c, h, w)


def _channel_shuffle_ref(x: jax.Array, groups: int) -> jax.Array:
    """Pure-JAX reference mirroring the PyTorch module exactly."""
    b, c, h, w = x.shape
    cpg = c // groups
    y = x.reshape(b, groups, cpg, h, w)
    y = jnp.transpose(y, (0, 2, 1, 3, 4))
    return y.reshape(b, c, h, w)


if __name__ == "__main__":
    key = jax.random.PRNGKey(0)
    B, C, H, W = 2, 4, 16, 16
    groups = 2

    x = jax.random.normal(key, (B, C, H, W), dtype=jnp.float32)
    ref = _channel_shuffle_ref(x, groups)

    # Exercise both code paths plus the auto heuristic.
    for mode in ("per_batch", "per_channel", "auto"):
        out = jax.block_until_ready(channel_shuffle(x, groups, mode=mode))
        assert out.shape == ref.shape, mode
        assert out.dtype == ref.dtype, mode
        assert jnp.array_equal(out, ref), f"Pallas output mismatch ({mode})"

    print("KERNEL_OK")
</pallas_src>

<mosaic_0001>
module attributes {stable_mosaic.version = 11 : i64} {
  func.func @_shuffle_per_batch_kernel(%arg0: i32, %arg1: memref<1x2x2x1x256xf32, #tpu.memory_space<vmem>>, %arg2: memref<1x2x2x1x256xf32, #tpu.memory_space<vmem>>) attributes {dimension_semantics = [#tpu.dimension_semantics<parallel>], iteration_bounds = array<i64: 2>, scalar_prefetch = 0 : i64, scratch_operands = 0 : i64, tpu.core_type = #tpu.core_type<tc>, window_params = [{transform_indices = @transform_0, window_bounds = array<i64: 1, 2, 2, 1, 256>}, {transform_indices = @transform_1, window_bounds = array<i64: 1, 2, 2, 1, 256>}]} {
    %c0 = arith.constant 0 : index
    %c0_0 = arith.constant 0 : index
    %c0_1 = arith.constant 0 : index
    %c0_2 = arith.constant 0 : index
    %c0_3 = arith.constant 0 : index
    %0 = vector.load %arg1[%c0, %c0_0, %c0_1, %c0_2, %c0_3] : memref<1x2x2x1x256xf32, #tpu.memory_space<vmem>>, vector<1x2x2x1x256xf32>
    %1 = tpu.transpose %0, [0, 2, 1, 3, 4] : vector<1x2x2x1x256xf32> -> vector<1x2x2x1x256xf32>
    %c0_4 = arith.constant 0 : index
    %c0_5 = arith.constant 0 : index
    %c0_6 = arith.constant 0 : index
    %c0_7 = arith.constant 0 : index
    %c0_8 = arith.constant 0 : index
    %2 = vector.load %arg2[%c0_4, %c0_5, %c0_6, %c0_7, %c0_8] : memref<1x2x2x1x256xf32, #tpu.memory_space<vmem>>, vector<1x2x2x1x256xf32>
    tpu.vector_store %arg2[%c0_4, %c0_5, %c0_6, %c0_7, %c0_8], %1 {strides = array<i32>} : memref<1x2x2x1x256xf32, #tpu.memory_space<vmem>>, vector<1x2x2x1x256xf32>,
    return
  }
  func.func @transform_0(%arg0: i32) -> (i32, i32, i32, i32, i32) {
    %c0_i32 = arith.constant 0 : i32
    %c0_i32_0 = arith.constant 0 : i32
    %c0_i32_1 = arith.constant 0 : i32
    %c0_i32_2 = arith.constant 0 : i32
    %c0_i32_3 = arith.constant 0 : i32
    return %arg0, %c0_i32, %c0_i32_0, %c0_i32_1, %c0_i32_2 : i32, i32, i32, i32, i32
  }
  func.func @transform_1(%arg0: i32) -> (i32, i32, i32, i32, i32) {
    %c0_i32 = arith.constant 0 : i32
    %c0_i32_0 = arith.constant 0 : i32
    %c0_i32_1 = arith.constant 0 : i32
    %c0_i32_2 = arith.constant 0 : i32
    %c0_i32_3 = arith.constant 0 : i32
    return %arg0, %c0_i32, %c0_i32_0, %c0_i32_1, %c0_i32_2 : i32, i32, i32, i32, i32
  }
}

</mosaic_0001>

<llo_original>
// kernel: tpu_custom_call.1
$region0: #{tpu_custom_call.1}
  #allocation0 [shape = 'u32[]', space=smem, size = 0x4, offset = 0x4, fixed_abs, tag = 'smem constant byte address 0x4 - core index']
  #allocation1 [shape = 'u32[144,128]{1,0:T(1,128)}', space=vmem, size = 0x12000, scoped, tag = 'internal scratch']
  %s0 = inlined_call_operand.hbm [shape: f32[2,2,2,1,256], index: 0, kind: input, shape index: {}]
  %s1 = inlined_call_operand.hbm [shape: f32[2,2,2,1,256], index: 1, kind: output, shape index: {}]
  %s2 = sld [smem:[#allocation0]]
  $region41: #{tpu_custom_call.1} parent=0
    _
  %s4 = ssub.s32 1, %s2
  %s5 = scalar_select 0, %s4, %s2
  $region1: #{tpu_custom_call.1} parent=0
    #allocation2 [shape = 'u8[8192]{0}', space=vmem, size = 0x2000, scoped, tag = 'input window, operand 0']
    #allocation3 [shape = 's32[2]{0}', space=sflag, size = 0x8, scoped, tag = 'scoped memory for tpu_custom_call.1']
    #allocation4 [shape = 's32[2]{0}', space=sflag, size = 0x8, scoped, tag = 'scoped memory for tpu_custom_call.1']
    #allocation5 [shape = 'u8[8192]{0}', space=vmem, size = 0x2000, scoped, tag = 'output window, operand 0']
    %6 = vsyncpa [#allocation3], 0
    %s7 = scalar_lea.sflag [#allocation3], 1
    %8 = vsyncpa %s7, 0
    %9 = vsyncpa [#allocation4], 0
    %s10 = scalar_lea.sflag [#allocation4], 1
    %11 = vsyncpa %s10, 0
    loop: start=0, step=1, limit=4
    $region2: #{tpu_custom_call.1} parent=1 // loop_pre_header
      _
    $region3: #{tpu_custom_call.1} parent=1 // loop_header
      %s13 = sphi 0, %s17
      %p14 = scmp.ge.s32.totalorder %s13, 4
      %s23 = sphi 0, %s25
      %s26 = sphi 0, %s23
      %s27 = sphi 0, %s26
      %s43 = sphi 0, %s27
      %s49 = sphi 0, %s51
      %s52 = sphi 0, %s49
      %s53 = sphi 0, %s52
      %s69 = sphi 0, %s53
    $region4: #{tpu_custom_call.1} parent=1 // loop_header_branch
      %16 = sbr.rel (%p14) target = $region8
    $region5: #{tpu_custom_call.1} parent=1 // loop_body
      %s18 = ssub.s32 %s13, 1
      %s19 = ssub.s32 %s13, 2
      %s20 = sadd.s32 %s13, 1
      %s21 = ssub.s32 %s13, %s20
      %p22 = scmp.eq.s32.totalorder %s21, 0
      %s24 = sadd.s32 %s23, 1
      %s25 = scalar_select %p22, %s23, %s24
      %p28 = pneg %p22
      %p29 = scmp.eq.s32.totalorder %s13, 1
      %p30 = por %p28, %p29
      %p31 = scmp.ne.s32.totalorder %s23, %s26
      %p32 = scmp.eq.s32.totalorder %s13, 0
      %p33 = por %p31, %p32
      %p34 = scmp.ne.s32.totalorder %s23, %s26
      %p35 = scmp.eq.s32.totalorder %s18, 1
      %p36 = por %p34, %p35
      %p37 = scmp.ne.s32.totalorder %s26, %s27
      %p38 = scmp.eq.s32.totalorder %s18, 0
      %p39 = por %p37, %p38
      %p40 = scmp.ne.s32.totalorder %s26, %s27
      %p41 = scmp.eq.s32.totalorder %s19, 1
      %p42 = por %p40, %p41
      %p44 = scmp.ne.s32.totalorder %s27, %s43
      %p45 = scmp.eq.s32.totalorder %s19, 0
      %p46 = por %p44, %p45
      %s47 = ssub.s32 %s13, %s20
      %p48 = scmp.eq.s32.totalorder %s47, 0
      %s50 = sadd.s32 %s49, 1
      %s51 = scalar_select %p48, %s49, %s50
      %p54 = pneg %p48
      %p55 = scmp.eq.s32.totalorder %s13, 1
      %p56 = por %p54, %p55
      %p57 = scmp.ne.s32.totalorder %s49, %s52
      %p58 = scmp.eq.s32.totalorder %s13, 0
      %p59 = por %p57, %p58
      %p60 = scmp.ne.s32.totalorder %s49, %s52
      %p61 = scmp.eq.s32.totalorder %s18, 1
      %p62 = por %p60, %p61
      %p63 = scmp.ne.s32.totalorder %s52, %s53
      %p64 = scmp.eq.s32.totalorder %s18, 0
      %p65 = por %p63, %p64
      %p66 = scmp.ne.s32.totalorder %s52, %s53
      %p67 = scmp.eq.s32.totalorder %s19, 1
      %p68 = por %p66, %p67
      %p70 = scmp.ne.s32.totalorder %s53, %s69
      %p71 = scmp.eq.s32.totalorder %s19, 0
      %p72 = por %p70, %p71
      %p73 = scmp.le.s32.totalorder 1, %s13
      %p74 = scmp.lt.s32.totalorder %s13, 3
      %p75 = pnand %p73, %p74
      %p76 = pneg %p75
      // Predicated region
      $region9: #{tpu_custom_call.1} parent=5 // pred_check
        _
      $region10: #{tpu_custom_call.1} parent=5 // pred_check_branch
        %78 = sbr.rel (%p75) target = $region12
      $region11: #{tpu_custom_call.1} parent=5 // pred_region
        %s79 = ssub.s32 %s13, 1
      $region12: #{tpu_custom_call.1} parent=5 // pred_fallthru
        _
      %p80 = scmp.lt.s32.totalorder %s13, 2
      // Predicated region
      $region13: #{tpu_custom_call.1} parent=5 // pred_check
        %p81 = pneg %p80
      $region14: #{tpu_custom_call.1} parent=5 // pred_check_branch
        %83 = sbr.rel (%p81) target = $region16
      $region15: #{tpu_custom_call.1} parent=5 // pred_region
        // Predicated region
        $region17: #{tpu_custom_call.1} parent=15 // pred_check
          %p84 = pneg %p33
        $region18: #{tpu_custom_call.1} parent=15 // pred_check_branch
          %86 = sbr.rel (%p84) target = $region20
        $region19: #{tpu_custom_call.1} parent=15 // pred_region
          %s87 = sand.u32 %s23, 1
          %s88 = scalar_lea.sflag [#allocation3], %s87
          %s89 = sand.u32 %s23, 1
          %s90 = smul.addr %s89, 8
          %s91 = scalar_lea.vmem [#allocation2], %s90
          %s93 = ssub.s32 128, 128
          %94 = vsyncadd %s88, %s93
          %s95 = smul.addr %s13, 8
          %s96 = smul.addr %s95, 16
          %s97 = scalar_lea.hbm %s0, %s96
          %s98 = sshll.u32 %s91, 4
          %s99 = int_to_ptr.vmem [resolvable:$true] %s98
          %104 = dma.hbm_to_vmem [thread:$0]  %s97, 128, %s99, %s88, 32, 32, 2
        $region20: #{tpu_custom_call.1} parent=15 // pred_fallthru
          _
      $region16: #{tpu_custom_call.1} parent=5 // pred_fallthru
        _
      %p105 = scmp.le.s32.totalorder 1, %s13
      %p106 = scmp.lt.s32.totalorder %s13, 3
      %p107 = pnand %p105, %p106
      %p108 = pneg %p107
      // Predicated region
      $region21: #{tpu_custom_call.1} parent=5 // pred_check
        _
      $region22: #{tpu_custom_call.1} parent=5 // pred_check_branch
        %110 = sbr.rel (%p107) target = $region24
      $region23: #{tpu_custom_call.1} parent=5 // pred_region
        %s111 = ssub.s32 %s13, 1
        %s112 = sand.u32 %s26, 1
        %s113 = scalar_lea.sflag [#allocation3], %s112
        %s114 = sand.u32 %s26, 1
        %s115 = smul.addr %s114, 8
        %s116 = scalar_lea.vmem [#allocation2], %s115
        // Predicated region
        $region25: #{tpu_custom_call.1} parent=23 // pred_check
          %p117 = pneg %p39
        $region26: #{tpu_custom_call.1} parent=23 // pred_check_branch
          %119 = sbr.rel (%p117) target = $region28
        $region27: #{tpu_custom_call.1} parent=23 // pred_region
          %120 = dma.done %s113, 128
        $region28: #{tpu_custom_call.1} parent=23 // pred_fallthru
          _
        %s121 = sand.u32 %s26, 1
        %s122 = scalar_lea.sflag [#allocation3], %s121
        %s123 = sand.u32 %s26, 1
        %s124 = smul.addr %s123, 8
        %s125 = scalar_lea.vmem [#allocation2], %s124
        %p126 = pneg %p39
        %p127 = pneg %p36
        %p128 = pneg %p65
        %p129 = pneg %p62
        %s130 = sand.u32 %s52, 1
        %s131 = scalar_lea.sflag [#allocation4], %s130
        %s132 = sand.u32 %s52, 1
        %s133 = smul.addr %s132, 8
        %s134 = scalar_lea.vmem [#allocation5], %s133
        %v135 = vld [vmem:[%s116] sm:$0x3]
        %v136 = vld [vmem:[%s116 + $0x2] sm:$0x3]
        %v137 = vld [vmem:[%s116 + $0x4] sm:$0x3]
        %v138 = vld [vmem:[%s116 + $0x6] sm:$0x3]
        %v139 = vlaneseq
        %vm140 = vcmp.ge.s32.totalorder %v139, 0
        %vm141 = vcmp.lt.s32.totalorder %v139, 256
        %vm142 = vmand %vm140, %vm141
        %143 = vst.msk [vmem:[%s134] sm:$0x3] %vm142, %v135
        %144 = vst.msk [vmem:[%s134 + $0x2] sm:$0x3] %vm142, %v137
        %145 = vst.msk [vmem:[%s134 + $0x4] sm:$0x3] %vm142, %v136
        %146 = vst.msk [vmem:[%s134 + $0x6] sm:$0x3] %vm142, %v138
        %s147 = sand.u32 %s52, 1
        %s148 = scalar_lea.sflag [#allocation4], %s147
        %s149 = sand.u32 %s52, 1
        %s150 = smul.addr %s149, 8
        %s151 = scalar_lea.vmem [#allocation5], %s150
        // Predicated region
        $region29: #{tpu_custom_call.1} parent=23 // pred_check
          %p152 = pneg %p62
        $region30: #{tpu_custom_call.1} parent=23 // pred_check_branch
          %154 = sbr.rel (%p152) target = $region32
        $region31: #{tpu_custom_call.1} parent=23 // pred_region
          %s156 = ssub.s32 128, 128
          %157 = vsyncadd %s148, %s156
          %s158 = smul.addr %s18, 8
          %s159 = smul.addr %s158, 16
          %s160 = scalar_lea.hbm %s1, %s159
          %s161 = sshll.u32 %s151, 4
          %s162 = int_to_ptr.vmem [resolvable:$true] %s161
          %167 = dma.vmem_to_hbm [thread:$0]  %s162, 128, %s160, %s148, 32, 32, 2
        $region32: #{tpu_custom_call.1} parent=23 // pred_fallthru
          _
      $region24: #{tpu_custom_call.1} parent=5 // pred_fallthru
        _
      %p168 = scmp.le.s32.totalorder 2, %s13
      // Predicated region
      $region33: #{tpu_custom_call.1} parent=5 // pred_check
        %p169 = pneg %p168
      $region34: #{tpu_custom_call.1} parent=5 // pred_check_branch
        %171 = sbr.rel (%p169) target = $region36
      $region35: #{tpu_custom_call.1} parent=5 // pred_region
        %s172 = ssub.s32 %s13, 2
        // Predicated region
        $region37: #{tpu_custom_call.1} parent=35 // pred_check
          %p173 = pneg %p68
        $region38: #{tpu_custom_call.1} parent=35 // pred_check_branch
          %175 = sbr.rel (%p173) target = $region40
        $region39: #{tpu_custom_call.1} parent=35 // pred_region
          %s176 = sand.u32 %s53, 1
          %s177 = scalar_lea.sflag [#allocation4], %s176
          %s178 = sand.u32 %s53, 1
          %s179 = smul.addr %s178, 8
          %s180 = scalar_lea.vmem [#allocation5], %s179
          %181 = dma.done %s177, 128
        $region40: #{tpu_custom_call.1} parent=35 // pred_fallthru
          _
      $region36: #{tpu_custom_call.1} parent=5 // pred_fallthru
        _
    $region6: #{tpu_custom_call.1} parent=1 // loop_footer
      %s17 = sadd.s32 1, %s13
    $region7: #{tpu_custom_call.1} parent=1 // loop_footer_branch
      %12 = sbr.rel target = $region3
    $region8: #{tpu_custom_call.1} parent=1 // loop_exit
      _
    %182 = vsyncpa [#allocation3], 1
    %s183 = scalar_lea.sflag [#allocation3], 1
    %184 = vsyncpa %s183, 1
    %185 = vsyncpa [#allocation4], 1
    %s186 = scalar_lea.sflag [#allocation4], 1
    %187 = vsyncpa %s186, 1

</llo_original>
